<compile_context>
chip_gen: v6e
topology: v6e:2x2x1
jax: 0.10.0
libtpu: 0.0.40
codegen_flags: <defaults>
</compile_context>

<pallas_src>
import math

import jax
import jax.numpy as jnp
from jax.experimental import pallas as pl
from jax.experimental.pallas import tpu as pltpu


# ----------------------------------------------------------------------------
# PE table construction (identical math to the PyTorch __init__).
# ----------------------------------------------------------------------------
def _sinusoidal_table(n_pos: int, d_model: int) -> jnp.ndarray:
    position = jnp.arange(n_pos, dtype=jnp.float32)[:, None]                       # (n_pos, 1)
    div_term = jnp.exp(
        jnp.arange(0, d_model, 2, dtype=jnp.float32) * (-math.log(10000.0) / d_model)
    )                                                                              # (d_model//2,)
    pe = jnp.zeros((n_pos, d_model), dtype=jnp.float32)
    pe = pe.at[:, 0::2].set(jnp.sin(position * div_term))
    pe = pe.at[:, 1::2].set(jnp.cos(position * div_term))
    return pe


# ----------------------------------------------------------------------------
# Kernel: pure VPU broadcast add. Works for both the single-block fast path
# ((B, L) + (1, L)) and the tiled path ((tb, tl) + (1, tl)).
# ----------------------------------------------------------------------------
def _pe_add_kernel(x_ref, pe_ref, o_ref):
    o_ref[...] = (x_ref[...] + pe_ref[...]).astype(o_ref.dtype)


# ----------------------------------------------------------------------------
# Tiling heuristics.
# ----------------------------------------------------------------------------
_SINGLE_BLOCK_FOOTPRINT_BYTES = 2 << 20  # x + out + pe all-in-VMEM fast path


def _divisors(n: int) -> set:
    ds, i = set(), 1
    while i * i <= n:
        if n % i == 0:
            ds.add(i)
            ds.add(n // i)
        i += 1
    return ds


def _sublane_multiple(dtype) -> int:
    # 8 for f32, 16 for bf16, 32 for int8: keeps packed vregs full and stores unmasked.
    return max(8, 32 // jnp.dtype(dtype).itemsize)


def _generation_defaults():
    """(target_tile_bytes, scoped_vmem_default_bytes) for the local TPU generation."""
    kind = ""
    try:
        kind = jax.devices()[0].device_kind.lower()
    except Exception:
        pass
    is_v5e = ("v5 lite" in kind) or ("v5e" in kind) or ("v5lite" in kind) or ("v5litepod" in kind)
    if is_v5e:
        # 16 MiB scoped-VMEM default: 2 MiB x-tiles -> ~8.5 MiB double-buffered footprint.
        return 2 << 20, 16 << 20
    # v6e / v7x: 32 MiB scoped default -> 4 MiB x-tiles (~17 MiB footprint) amortize
    # the per-step overhead better, especially on v7x's 3.2 TB/s HBM.
    return 4 << 20, 32 << 20


def _pick_tiles(batch: int, lanes: int, itemsize: int, sublane: int, target_tile_bytes: int):
    """Choose (tb, tl) obeying the (8,128)/full-extent block rule.

    Grow the batch tile first (multiples of the dtype sublane packing) toward the
    target tile size; only if the smallest aligned batch tile still overshoots do
    we shrink the lane tile (largest multiple-of-128 divisor that fits).
    """
    lane_cands = sorted({d for d in _divisors(lanes) if d % 128 == 0} | {lanes})
    batch_cands = sorted({d for d in _divisors(batch) if d % sublane == 0} | {batch})

    tl = lanes
    tb = batch_cands[0]
    for cand in batch_cands:            # ascending; take the largest that fits
        if cand * tl * itemsize <= target_tile_bytes:
            tb = cand
    if tb * tl * itemsize > target_tile_bytes:
        tb = batch_cands[0]
        fitting = [c for c in lane_cands if tb * c * itemsize <= target_tile_bytes]
        tl = max(fitting) if fitting else lane_cands[0]
    return tb, tl


# ----------------------------------------------------------------------------
# Module wrapper.
# ----------------------------------------------------------------------------
class PositionalEncodingPallas:
    def __init__(self, d_model: int, max_len: int = 512, n_channels: int = 129):
        self.d_model = d_model
        self.pe_temporal = _sinusoidal_table(max_len, d_model)      # (max_len, d_model)
        self.pe_spatial = _sinusoidal_table(n_channels, d_model)    # (n_channels, d_model)
        self._pe_cache = {}  # (n_patches, n_channels) -> (1, P*D) f32 flattened table

    def _combined_pe_flat(self, n_patches: int, n_channels: int) -> jnp.ndarray:
        key = (n_patches, n_channels)
        pe2 = self._pe_cache.get(key)
        if pe2 is None:
            combined = (
                self.pe_temporal[:n_patches]
                + jnp.mean(self.pe_spatial[:n_channels], axis=0)[None, :]
            )                                                        # (P, D) f32
            pe2 = combined.reshape(1, n_patches * self.d_model)
            self._pe_cache[key] = pe2
        return pe2

    def __call__(
        self,
        x_patches: jnp.ndarray,
        x_embedded: jnp.ndarray,
        *,
        single_block_bytes: int | None = None,
        target_tile_bytes: int | None = None,
    ) -> jnp.ndarray:
        batch_size, n_patches, n_channels, _patch_size = x_patches.shape
        _, _, d_model = x_embedded.shape
        if n_patches > self.pe_temporal.shape[0]:
            raise ValueError(
                f"n_patches ({n_patches}) exceeds max_len ({self.pe_temporal.shape[0]})"
            )
        if n_channels > self.pe_spatial.shape[0]:
            raise ValueError(
                f"n_channels ({n_channels}) exceeds spatial max ({self.pe_spatial.shape[0]})"
            )

        pe2 = self._combined_pe_flat(n_patches, n_channels)          # (1, L) f32, cached

        B = batch_size
        L = n_patches * d_model
        # Lane-dense layout: fold (P, D) into the trailing axis so the output block's
        # last dim is a large multiple of the lane width even when d_model < 128.
        x2 = x_embedded.reshape(B, L)
        itemsize = jnp.dtype(x_embedded.dtype).itemsize

        gen_tile_target, scoped_default = _generation_defaults()
        if target_tile_bytes is None:
            target_tile_bytes = gen_tile_target
        if single_block_bytes is None:
            single_block_bytes = _SINGLE_BLOCK_FOOTPRINT_BYTES

        # ---- Single-block fast path: no grid, no pipeline overhead. ----
        footprint_single = 2 * B * L * itemsize + L * 4
        if footprint_single <= single_block_bytes:
            out2 = pl.pallas_call(
                _pe_add_kernel,
                out_shape=jax.ShapeDtypeStruct((B, L), x_embedded.dtype),
            )(x2, pe2)
            return out2.reshape(x_embedded.shape)

        # ---- Tiled path: adaptive, dtype-aware tiles. ----
        sublane = _sublane_multiple(x_embedded.dtype)
        tb, tl = _pick_tiles(B, L, itemsize, sublane, target_tile_bytes)
        # Lane-tile axis slow, batch axis fast: the PE block index repeats across
        # consecutive batch steps, so Pallas keeps the PE tile resident in VMEM.
        grid = (L // tl, B // tb)

        # Footprint estimate: x + out double-buffered + PE tiles; raise the scoped
        # VMEM limit only if we would crowd this generation's default.
        tile_bytes = tb * tl * itemsize
        footprint = 4 * tile_bytes + 2 * tl * 4
        vmem_limit = None
        if footprint > (scoped_default * 3) // 4:
            vmem_limit = min(footprint + (8 << 20), 56 << 20)

        out2 = pl.pallas_call(
            _pe_add_kernel,
            out_shape=jax.ShapeDtypeStruct((B, L), x_embedded.dtype),
            grid=grid,
            in_specs=[
                pl.BlockSpec((tb, tl), lambda l, b: (b, l)),   # x tile
                pl.BlockSpec((1, tl), lambda l, b: (0, l)),    # PE tile (batch-resident)
            ],
            out_specs=pl.BlockSpec((tb, tl), lambda l, b: (b, l)),
            compiler_params=pltpu.CompilerParams(
                dimension_semantics=("parallel", "parallel"),
                vmem_limit_bytes=vmem_limit,
            ),
        )(x2, pe2)
        return out2.reshape(x_embedded.shape)


# ----------------------------------------------------------------------------
# Pure-JAX reference + tests.
# ----------------------------------------------------------------------------
def _reference(pe_t_full, pe_s_full, x_patches, x_embedded):
    _, n_patches, n_channels, _ = x_patches.shape
    pe_s = pe_s_full[:n_channels]                      # (C, D)
    pe_t = pe_t_full[:n_patches]                       # (P, D)
    combined = pe_t + jnp.mean(pe_s, axis=0)[None, :]  # (P, D)
    return x_embedded + combined[None, :, :]


def _run_case(batch, n_patches, n_channels, patch_size, d_model, max_len, max_channels,
              seed, dtype=jnp.float32, atol=1e-5, **call_kwargs):
    key = jax.random.PRNGKey(seed)
    k1, k2 = jax.random.split(key)
    x_patches = jax.random.normal(k1, (batch, n_patches, n_channels, patch_size), jnp.float32)
    x_embedded = jax.random.normal(k2, (batch, n_patches, d_model), jnp.float32).astype(dtype)

    module = PositionalEncodingPallas(d_model=d_model, max_len=max_len, n_channels=max_channels)
    out = module(x_patches, x_embedded, **call_kwargs)
    out = jax.block_until_ready(out)

    ref = _reference(module.pe_temporal, module.pe_spatial, x_patches, x_embedded)
    assert out.shape == x_embedded.shape and out.dtype == x_embedded.dtype
    assert jnp.allclose(out.astype(jnp.float32), ref.astype(jnp.float32), atol=atol, rtol=1e-3), \
        "mismatch vs reference"


if __name__ == "__main__":
    # 1) Small demo-sized shapes -> single-block fast path.
    _run_case(batch=2, n_patches=8, n_channels=16, patch_size=4,
              d_model=32, max_len=64, max_channels=32, seed=0)
    # 2) Force the tiled path (multi-step grid, resident PE tile), f32.
    _run_case(batch=16, n_patches=16, n_channels=8, patch_size=4,
              d_model=128, max_len=32, max_channels=129, seed=0,
              single_block_bytes=0, target_tile_bytes=64 << 10)
    # 3) Force the tiled path with bf16 input (sublane packing = 16).
    _run_case(batch=32, n_patches=16, n_channels=8, patch_size=4,
              d_model=128, max_len=32, max_channels=129, seed=1,
              dtype=jnp.bfloat16, atol=5e-2,
              single_block_bytes=0, target_tile_bytes=64 << 10)
    print("KERNEL_OK")
</pallas_src>

<mosaic_0001>
module attributes {stable_mosaic.version = 11 : i64} {
  func.func @_pe_add_kernel(%arg0: memref<2x256xf32, #tpu.memory_space<vmem>>, %arg1: memref<1x256xf32, #tpu.memory_space<vmem>>, %arg2: memref<2x256xf32, #tpu.memory_space<vmem>>) attributes {dimension_semantics = [], scalar_prefetch = 0 : i64, scratch_operands = 0 : i64, tpu.core_type = #tpu.core_type<tc>} {
    %c0 = arith.constant 0 : index
    %c0_0 = arith.constant 0 : index
    %0 = vector.load %arg0[%c0, %c0_0] : memref<2x256xf32, #tpu.memory_space<vmem>>, vector<2x256xf32>
    %c0_1 = arith.constant 0 : index
    %c0_2 = arith.constant 0 : index
    %1 = vector.load %arg1[%c0_1, %c0_2] : memref<1x256xf32, #tpu.memory_space<vmem>>, vector<1x256xf32>
    %2 = vector.broadcast %1 : vector<1x256xf32> to vector<2x256xf32>
    %3 = arith.addf %0, %2 : vector<2x256xf32>
    %c0_3 = arith.constant 0 : index
    %c0_4 = arith.constant 0 : index
    %4 = vector.load %arg2[%c0_3, %c0_4] : memref<2x256xf32, #tpu.memory_space<vmem>>, vector<2x256xf32>
    tpu.vector_store %arg2[%c0_3, %c0_4], %3 {strides = array<i32>} : memref<2x256xf32, #tpu.memory_space<vmem>>, vector<2x256xf32>,
    return
  }
}

</mosaic_0001>

<llo_original>
// kernel: tpu_custom_call.1
$region0: #{tpu_custom_call.1}
  #allocation0 [shape = 'u32[]', space=smem, size = 0x4, offset = 0x4, fixed_abs, tag = 'smem constant byte address 0x4 - core index']
  #allocation1 [shape = 'u32[144,128]{1,0:T(1,128)}', space=vmem, size = 0x12000, scoped, tag = 'internal scratch']
  %s0 = inlined_call_operand.hbm [shape: f32[2,256], index: 0, kind: input, shape index: {}]
  %s1 = inlined_call_operand.hbm [shape: f32[1,256], index: 1, kind: input, shape index: {}]
  %s2 = inlined_call_operand.hbm [shape: f32[2,256], index: 2, kind: output, shape index: {}]
  %s3 = sld [smem:[#allocation0]]
  $region26: #{tpu_custom_call.1} parent=0
    _
  %s5 = ssub.s32 1, %s3
  %s6 = scalar_select 0, %s5, %s3
  $region1: #{tpu_custom_call.1} parent=0
    #allocation2 [shape = 'u8[2048]{0}', space=vmem, size = 0x800, scoped, tag = 'input window, operand 0, single buffered']
    #allocation3 [shape = 's32[1]{0}', space=sflag, size = 0x4, scoped, tag = 'scoped memory for tpu_custom_call.1']
    #allocation4 [shape = 's32[1]{0}', space=sflag, size = 0x4, scoped, tag = 'scoped memory for tpu_custom_call.1']
    #allocation5 [shape = 'u8[1024]{0}', space=vmem, size = 0x400, scoped, tag = 'input window, operand 1, single buffered']
    #allocation6 [shape = 's32[1]{0}', space=sflag, size = 0x4, scoped, tag = 'scoped memory for tpu_custom_call.1']
    #allocation7 [shape = 'u8[2048]{0}', space=vmem, size = 0x800, scoped, tag = 'output window, operand 0, single buffered']
    %7 = vsyncpa [#allocation3], 0
    %8 = vsyncpa [#allocation6], 0
    %9 = vsyncpa [#allocation4], 0
    // Predicated region
    $region2: #{tpu_custom_call.1} parent=1 // pred_check
      _
    $region3: #{tpu_custom_call.1} parent=1 // pred_check_branch
      %11 = sbr.rel (0) target = $region5
    $region4: #{tpu_custom_call.1} parent=1 // pred_region
      %s13 = ssub.s32 64, 64
      %14 = vsyncadd [#allocation3], %s13
      %s16 = sshll.u32 [#allocation2], 4
      %s17 = int_to_ptr.vmem [resolvable:$true] %s16
      %19 = dma.hbm_to_vmem [thread:$0]  %s0, 64, %s17, [#allocation3]
    $region5: #{tpu_custom_call.1} parent=1 // pred_fallthru
      _
    // Predicated region
    $region6: #{tpu_custom_call.1} parent=1 // pred_check
      _
    $region7: #{tpu_custom_call.1} parent=1 // pred_check_branch
      %21 = sbr.rel (0) target = $region9
    $region8: #{tpu_custom_call.1} parent=1 // pred_region
      %s23 = ssub.s32 32, 32
      %24 = vsyncadd [#allocation6], %s23
      %s26 = sshll.u32 [#allocation5], 4
      %s27 = int_to_ptr.vmem [resolvable:$true] %s26
      %29 = dma.hbm_to_vmem [thread:$0]  %s1, 32, %s27, [#allocation6]
    $region9: #{tpu_custom_call.1} parent=1 // pred_fallthru
      _
    // Predicated region
    $region10: #{tpu_custom_call.1} parent=1 // pred_check
      _
    $region11: #{tpu_custom_call.1} parent=1 // pred_check_branch
      %31 = sbr.rel (0) target = $region13
    $region12: #{tpu_custom_call.1} parent=1 // pred_region
      %32 = dma.done [#allocation3], 64
    $region13: #{tpu_custom_call.1} parent=1 // pred_fallthru
      _
    // Predicated region
    $region14: #{tpu_custom_call.1} parent=1 // pred_check
      _
    $region15: #{tpu_custom_call.1} parent=1 // pred_check_branch
      %34 = sbr.rel (0) target = $region17
    $region16: #{tpu_custom_call.1} parent=1 // pred_region
      %35 = dma.done [#allocation6], 32
    $region17: #{tpu_custom_call.1} parent=1 // pred_fallthru
      _
    %v36 = vld [vmem:[#allocation2] sm:$0xf]
    %v37 = vld [vmem:[#allocation5] sm:$0x3]
    %v39 = vlaneseq
    %v40 = vshrl.u32 %v39, 7
    %v41 = vsub.s32 0, %v40
    %v42 = vrot.slane %v37, %v41
    %v43 = vlaneseq
    %v44 = vshrl.u32 %v43, 7
    %v45 = vsub.s32 1, %v44
    %v46 = vrot.slane %v37, %v45
    %v47 = vcombine.low %v42, %v46
    %v49 = vunpack.c.l.s4 1983009808
    %v50 = vunpack.c.0.s8 %v49
    %v51 = vlaneseq
    %v52 = vshrl.u32 %v51, 7
    %v53 = vsub.s32 %v50, %v52
    %v54 = vrot.slane %v47, %v53
    %v56 = vadd.f32 %v36, %v54
    %57 = vst [vmem:[#allocation7] sm:$0xf] %v56
    // Predicated region
    $region18: #{tpu_custom_call.1} parent=1 // pred_check
      _
    $region19: #{tpu_custom_call.1} parent=1 // pred_check_branch
      %59 = sbr.rel (0) target = $region21
    $region20: #{tpu_custom_call.1} parent=1 // pred_region
      %s61 = ssub.s32 64, 64
      %62 = vsyncadd [#allocation4], %s61
      %s64 = sshll.u32 [#allocation7], 4
      %s65 = int_to_ptr.vmem [resolvable:$true] %s64
      %67 = dma.vmem_to_hbm [thread:$0]  %s65, 64, %s2, [#allocation4]
    $region21: #{tpu_custom_call.1} parent=1 // pred_fallthru
      _
    // Predicated region
    $region22: #{tpu_custom_call.1} parent=1 // pred_check
      _
    $region23: #{tpu_custom_call.1} parent=1 // pred_check_branch
      %69 = sbr.rel (0) target = $region25
    $region24: #{tpu_custom_call.1} parent=1 // pred_region
      %70 = dma.done [#allocation4], 64
    $region25: #{tpu_custom_call.1} parent=1 // pred_fallthru
      _
    %71 = vsyncpa [#allocation3], 1
    %72 = vsyncpa [#allocation6], 1
    %73 = vsyncpa [#allocation4], 1

</llo_original>
